<compile_context>
chip_gen: v5e
topology: v5e:2x2
jax: 0.10.0
libtpu: 0.0.40
codegen_flags: <defaults>
</compile_context>

<pallas_src>
import numpy as np
import jax
import jax.numpy as jnp
from jax.experimental import pallas as pl
from jax.experimental.pallas import tpu as pltpu  # noqa: F401  (not needed for this one-shot kernel)

# ----------------------- model hyper-parameters (small) -----------------------
B = 2                    # batch of graphs
N = 8                    # n_max_nodes
BN = B * N               # flattened node count = 16
FIN = 4                  # input_dim
HID = 16                 # hidden_dim_enc (== encoder latent_dim in the VAE ctor)
HEADS = 4                # GATConv heads
HHC = HID * HEADS        # concatenated GAT output width = 64
NCOND = 3                # n_condition
LAT = 8                  # latent_dim
HID_DEC = 32             # hidden_dim_dec
M = N * (N - 1) // 2     # upper-triangular entries = 28
BN_EPS = 1e-5

BPAD = 8                 # batch rows padded to one sublane tile
XPAD = 8                 # node-feature / cond column pad
OUT_LANES = 128          # lane-dense output width (>= N*N)
HB = HEADS * BN          # lane-concatenated head dimension = 64


# ============================== slab packing ==================================
def _pack(entries, row_align, dtype):
    """Pack small 2-D arrays into one (rows, 128) slab; returns (slab, row offsets)."""
    offs, r = {}, 0
    for name, arr in entries:
        offs[name] = r
        r += -(-arr.shape[0] // row_align) * row_align
    slab = np.zeros((r, 128), np.float32)
    for name, arr in entries:
        a = np.asarray(arr, np.float32)
        slab[offs[name]:offs[name] + a.shape[0], :a.shape[1]] = a
    return jnp.asarray(slab, dtype), offs


# ================================ fused kernel ================================
def make_vae_kernel(woff, foff):
    """Kernel closure over the static slab row offsets."""

    def kernel(xa_ref, cg_ref, w_ref, f_ref, out_ref):
        def b16(v):
            return v.astype(jnp.bfloat16)

        def dotf(a, b):
            return jnp.dot(a, b, preferred_element_type=jnp.float32)

        def leaky(v):
            return jnp.maximum(v, 0.2 * v)

        def wget(name, rows, cols):            # bf16 weight slab view
            r = woff[name]
            return w_ref[r:r + rows, :cols]

        def fget(name, rows, cols):            # f32 aux slab view
            r = foff[name]
            return f_ref[r:r + rows, :cols]

        # -------- data (already padded/packed host-side) --------
        x = xa_ref[:, 0:XPAD]                  # (16, 8)  node feats (cols FIN.. zero)
        adj_all = xa_ref[:, XPAD:XPAD + HB]    # (16, 64) head-tiled block-diag adjacency
        cond = cg_ref[:, 0:XPAD]               # (8, 8)   condition (cols NCOND.. zero)
        gdiff = cg_ref[:, XPAD:XPAD + M]       # (8, 28)  g0 - g1 gumbel noise

        # -------- structure matrices shared by both GAT layers --------
        rdst = wget("rdst", HHC + 2 * HEADS, HB)     # dst score -> its head's lane block
        rsrc = wget("rsrc", HHC + 2 * HEADS, HB)     # src score -> its head's lane block
        rep = wget("rep", HB, BN)                    # stack h once per head (rows)
        diagmask = fget("diagmask", BN, HB)          # picks src[j] for lane hd*BN+j
        summat = fget("summat", HB, HB)              # per-head-block row sums (broadcast)
        hmaskbig = fget("hmaskbig", HB, HHC)         # per-head output-column mask

        def gat_layer(h_in, waug, bias):
            # one matmul -> [ h (64 cols) | src scores (4) | dst scores (4) ]
            haug = dotf(b16(h_in), waug)                              # (16, 72) f32
            haug16 = b16(haug)
            dst_b = dotf(haug16, rdst)                                # (16, 64) dst[i,hd]
            src_b = dotf(haug16, rsrc)                                # (16, 64) src[i,hd]
            src_row = jnp.sum(src_b * diagmask, axis=0, keepdims=True)  # (1, 64) src[j,hd]
            e = leaky(dst_b + src_row)            # e[i, hd*BN+j] = LReLU(dst_i + src_j)
            em = jnp.where(adj_all > 0, e, -1e30)
            # exp(-1e30 - rowmax) == 0 exactly, so no second mask is needed
            ex = jnp.exp(em - jnp.max(em, axis=1, keepdims=True))
            denom = dotf(ex, summat)              # per-head softmax denominators (bcast)
            p = ex * pl.reciprocal(denom, approx=True)
            # aggregation: out[i, c] = sum_j p_head(c)[i, j] * h[j, c]
            hstack = dotf(rep, haug16[:, 0:HHC]) * hmaskbig           # (64, 64)
            return dotf(b16(p), b16(hstack)) + bias                   # (16, 64)

        h1 = leaky(gat_layer(x, wget("waug1", XPAD, HHC + 2 * HEADS), fget("b1", 1, HHC)))
        h2 = leaky(gat_layer(h1, wget("waug2", HHC, HHC + 2 * HEADS), fget("b2", 1, HHC)))

        # global_add_pool as one matmul with the (8, 16) segment matrix (pad rows = 0)
        pooled = dotf(wget("pool", BPAD, BN), b16(h2))                # (8, 64)

        # BatchNorm(eval) + fc + fc_mu + decoder.mlp[0] folded host-side (all linear).
        # TODO(synk): fc_logvar + reparameterization noise are training-only; eval uses mu.
        d = jnp.maximum(dotf(b16(pooled), wget("wpd", HHC, HID_DEC))
                        + dotf(b16(cond), wget("wcd", XPAD, HID_DEC))
                        + fget("bd1f", 1, HID_DEC), 0.0)              # (8, 32)
        d = jnp.maximum(dotf(b16(d), wget("wd2", HID_DEC, HID_DEC))
                        + fget("bd2", 1, HID_DEC), 0.0)               # (8, 32)

        # hard gumbel-softmax (tau=1): component 0 wins iff (l0+g0) - (l1+g1) >= 0
        score = (dotf(b16(d), wget("wdiff", HID_DEC, M))
                 + fget("bdiff", 1, M) + gdiff)                       # (8, 28)
        sel = (score >= 0.0).astype(jnp.float32)
        # scatter to upper triangle + symmetrize; 128-lane padded -> dense store
        out_ref[...] = dotf(b16(sel), wget("ssym", M, OUT_LANES))     # (8, 128)

    return kernel


# ============================ raw model parameters ============================
def make_params(key):
    ks = jax.random.split(key, 18)
    it = iter(range(18))

    def nrm(shape, scale):
        return jax.random.normal(ks[next(it)], shape, jnp.float32) * scale

    p = {}
    # GAT layer 1: lin (FIN -> HEADS*HID), att_src/att_dst (HEADS, HID), bias
    p["w1"] = nrm((FIN, HHC), 0.4)
    p["as1"] = nrm((HEADS, HID), 0.4)
    p["ad1"] = nrm((HEADS, HID), 0.4)
    p["b1"] = jnp.zeros((1, HHC), jnp.float32)
    # GAT layer 2: (HHC -> HEADS*HID)
    p["w2"] = nrm((HHC, HHC), 0.15)
    p["as2"] = nrm((HEADS, HID), 0.3)
    p["ad2"] = nrm((HEADS, HID), 0.3)
    p["b2"] = jnp.zeros((1, HHC), jnp.float32)
    # BatchNorm1d(HHC + NCOND) running stats / affine (torch defaults)
    D = HHC + NCOND
    p["bng"], p["bnb"] = jnp.ones((D,), jnp.float32), jnp.zeros((D,), jnp.float32)
    p["bnm"], p["bnv"] = jnp.zeros((D,), jnp.float32), jnp.ones((D,), jnp.float32)
    # encoder fc: (HHC + NCOND) -> HID ; fc_mu: HID -> LAT
    p["wfc"], p["bfc"] = nrm((D, HID), 0.12), nrm((1, HID), 0.1)
    p["wmu"], p["bmu"] = nrm((HID, LAT), 0.25), nrm((1, LAT), 0.1)
    # decoder MLP: LAT -> HID_DEC -> HID_DEC -> 2*M (interleaved (pair, component))
    p["wd1"], p["bd1"] = nrm((LAT, HID_DEC), 0.35), nrm((1, HID_DEC), 0.1)
    p["wd2"], p["bd2"] = nrm((HID_DEC, HID_DEC), 0.18), nrm((1, HID_DEC), 0.1)
    p["wd3"], p["bd3"] = nrm((HID_DEC, 2 * M), 0.18), nrm((1, 2 * M), 0.1)
    # gumbel noise for F.gumbel_softmax(tau=1, hard=True)
    p["gumbel"] = jax.random.gumbel(ks[next(it)], (B, M, 2), jnp.float32)
    return p


# =================== host-side folding into kernel-ready slabs ================
def prepare_kernel_params(p):
    f32 = lambda a: np.asarray(a, np.float32)

    # ---- fold attention projection into the node projection: [W | W@a_src | W@a_dst]
    def fold_att(w, a_src, a_dst):
        a = np.zeros((HHC, 2 * HEADS), np.float32)
        for hd in range(HEADS):
            a[hd * HID:(hd + 1) * HID, hd] = a_src[hd]
            a[hd * HID:(hd + 1) * HID, HEADS + hd] = a_dst[hd]
        return np.concatenate([f32(w), f32(w) @ a], axis=1)

    waug1 = np.zeros((XPAD, HHC + 2 * HEADS), np.float32)
    waug1[:FIN] = fold_att(p["w1"], f32(p["as1"]), f32(p["ad1"]))      # x is col-padded to 8
    waug2 = fold_att(p["w2"], f32(p["as2"]), f32(p["ad2"]))            # (64, 72)

    # ---- head-batching structure matrices (shared by both layers)
    rdst = np.zeros((HHC + 2 * HEADS, HB), np.float32)
    rsrc = np.zeros((HHC + 2 * HEADS, HB), np.float32)
    rep = np.zeros((HB, BN), np.float32)
    summat = np.zeros((HB, HB), np.float32)
    hmaskbig = np.zeros((HB, HHC), np.float32)
    diagmask = np.zeros((BN, HB), np.float32)
    for hd in range(HEADS):
        rsrc[HHC + hd, hd * BN:(hd + 1) * BN] = 1.0
        rdst[HHC + HEADS + hd, hd * BN:(hd + 1) * BN] = 1.0
        summat[hd * BN:(hd + 1) * BN, hd * BN:(hd + 1) * BN] = 1.0
        hmaskbig[hd * BN:(hd + 1) * BN, hd * HID:(hd + 1) * HID] = 1.0
        for j in range(BN):
            rep[hd * BN + j, j] = 1.0
            diagmask[j, hd * BN + j] = 1.0

    # ---- global_add_pool segment matrix (batch rows padded to 8)
    pool = np.zeros((BPAD, BN), np.float32)
    for b in range(B):
        pool[b, b * N:(b + 1) * N] = 1.0

    # ---- fold eval BatchNorm into fc, then collapse fc -> fc_mu -> decoder.mlp[0]
    s = f32(p["bng"]) / np.sqrt(f32(p["bnv"]) + BN_EPS)
    t = f32(p["bnb"]) - f32(p["bnm"]) * s
    wfc = f32(p["wfc"]) * s[:, None]
    bfc = f32(p["bfc"]) + t[None, :] @ f32(p["wfc"])
    lin = f32(p["wmu"]) @ f32(p["wd1"])                                # (HID, HID_DEC)
    wpd = wfc[:HHC] @ lin                                              # (64, 32)
    wcd = np.zeros((XPAD, HID_DEC), np.float32)
    wcd[:NCOND] = wfc[HHC:] @ lin                                      # cond rows padded
    bd1f = (bfc @ f32(p["wmu"]) + f32(p["bmu"])) @ f32(p["wd1"]) + f32(p["bd1"])

    # ---- decoder head: pick comp0 vs comp1 with one difference matmul
    wd3, bd3 = f32(p["wd3"]), f32(p["bd3"])
    wdiff = wd3[:, 0::2] - wd3[:, 1::2]                                # (32, 28)
    bdiff = bd3[:, 0::2] - bd3[:, 1::2]                                # (1, 28)
    g = f32(p["gumbel"])
    gdiff = g[:, :, 0] - g[:, :, 1]                                    # (B, 28)

    # ---- triu scatter + symmetrize, padded to 128 lanes for a dense store
    ssym = np.zeros((M, OUT_LANES), np.float32)
    k = 0
    for r in range(N):
        for c in range(r + 1, N):
            ssym[k, r * N + c] = 1.0
            ssym[k, c * N + r] = 1.0
            k += 1

    wslab, woff = _pack(
        [("waug1", waug1), ("waug2", waug2), ("rdst", rdst), ("rsrc", rsrc),
         ("rep", rep), ("pool", pool), ("wpd", wpd), ("wcd", wcd),
         ("wd2", f32(p["wd2"])), ("wdiff", wdiff), ("ssym", ssym)],
        row_align=16, dtype=jnp.bfloat16)
    fslab, foff = _pack(
        [("b1", f32(p["b1"])), ("b2", f32(p["b2"])), ("diagmask", diagmask),
         ("summat", summat), ("hmaskbig", hmaskbig), ("bd1f", bd1f),
         ("bd2", f32(p["bd2"])), ("bdiff", bdiff)],
        row_align=8, dtype=jnp.float32)

    return {"wslab": wslab, "woff": woff, "fslab": fslab, "foff": foff, "gdiff": gdiff}


# ================================ forward pass ================================
def vae_forward(x, adj_mask, cond, kp):
    # host-side glue (same info as edge_index + batch): flatten nodes, build the
    # head-tiled block-diagonal message mask, pack data into two lane-friendly operands
    x_np = np.asarray(x, np.float32).reshape(BN, FIN)
    adj_np = np.asarray(adj_mask, np.float32)
    adj_bd = np.zeros((BN, BN), np.float32)
    for b in range(B):
        adj_bd[b * N:(b + 1) * N, b * N:(b + 1) * N] = adj_np[b]
    xa = np.zeros((BN, XPAD + HB), np.float32)          # (16, 72) = [x | adj tiled x4]
    xa[:, :FIN] = x_np
    xa[:, XPAD:] = np.tile(adj_bd, (1, HEADS))

    cg = np.zeros((BPAD, XPAD + M), np.float32)         # (8, 36) = [cond | gumbel diff]
    cg[:B, :NCOND] = np.asarray(cond, np.float32)
    cg[:B, XPAD:] = np.asarray(kp["gdiff"], np.float32)

    call = pl.pallas_call(
        make_vae_kernel(kp["woff"], kp["foff"]),
        out_shape=jax.ShapeDtypeStruct((BPAD, OUT_LANES), jnp.float32),
    )
    out = jax.jit(call)(jnp.asarray(xa), jnp.asarray(cg), kp["wslab"], kp["fslab"])
    return out[:B, :N * N].reshape(B, N, N)


# =================================== main =====================================
if __name__ == "__main__":
    key = jax.random.PRNGKey(0)
    k_x, k_a, k_c, k_p = jax.random.split(key, 4)

    # node features (B, N, FIN)
    x = jax.random.normal(k_x, (B, N, FIN), jnp.float32)
    # random undirected graph per batch -> dense message mask with self-loops
    r = jax.random.uniform(k_a, (B, N, N))
    a = (r < 0.35).astype(jnp.float32)
    a = jnp.maximum(a, jnp.transpose(a, (0, 2, 1)))
    eye = jnp.eye(N, dtype=jnp.float32)
    adj_mask = jnp.minimum(a * (1.0 - eye) + eye, 1.0)
    # condition stats (data.stats), reshaped to (B, NCOND)
    cond = jax.random.normal(k_c, (B, NCOND), jnp.float32)

    params = make_params(k_p)
    kparams = prepare_kernel_params(params)

    adj = vae_forward(x, adj_mask, cond, kparams)
    adj = jax.block_until_ready(adj)

    # sanity checks on the decoded adjacency
    assert adj.shape == (B, N, N)
    assert bool(jnp.all(jnp.isfinite(adj)))
    assert bool(jnp.allclose(adj, jnp.transpose(adj, (0, 2, 1))))       # symmetric
    assert bool(jnp.all((adj == 0.0) | (adj == 1.0)))                   # hard gumbel picks
    assert bool(jnp.all(jnp.diagonal(adj, axis1=1, axis2=2) == 0.0))    # zero diagonal

    print("KERNEL_OK")
</pallas_src>

<mosaic_0001>
module attributes {stable_mosaic.version = 11 : i64} {
  func.func @kernel(%arg0: memref<16x72xf32, #tpu.memory_space<vmem>>, %arg1: memref<8x36xf32, #tpu.memory_space<vmem>>, %arg2: memref<496x128xbf16, #tpu.memory_space<vmem>>, %arg3: memref<184x128xf32, #tpu.memory_space<vmem>>, %arg4: memref<8x128xf32, #tpu.memory_space<vmem>>) attributes {dimension_semantics = [], scalar_prefetch = 0 : i64, scratch_operands = 0 : i64, tpu.core_type = #tpu.core_type<tc>} {
    %c0 = arith.constant 0 : index
    %c0_0 = arith.constant 0 : index
    %0 = vector.load %arg0[%c0, %c0_0] : memref<16x72xf32, #tpu.memory_space<vmem>>, vector<16x8xf32>
    %c0_1 = arith.constant 0 : index
    %c8 = arith.constant 8 : index
    %1 = vector.load %arg0[%c0_1, %c8] : memref<16x72xf32, #tpu.memory_space<vmem>>, vector<16x64xf32>
    %c0_2 = arith.constant 0 : index
    %c0_3 = arith.constant 0 : index
    %2 = vector.load %arg1[%c0_2, %c0_3] : memref<8x36xf32, #tpu.memory_space<vmem>>, vector<8x8xf32>
    %c0_4 = arith.constant 0 : index
    %c8_5 = arith.constant 8 : index
    %3 = vector.load %arg1[%c0_4, %c8_5] : memref<8x36xf32, #tpu.memory_space<vmem>>, vector<8x28xf32>
    %c80 = arith.constant 80 : index
    %c0_6 = arith.constant 0 : index
    %4 = vector.load %arg2[%c80, %c0_6] : memref<496x128xbf16, #tpu.memory_space<vmem>>, vector<72x64xbf16>
    %c160 = arith.constant 160 : index
    %c0_7 = arith.constant 0 : index
    %5 = vector.load %arg2[%c160, %c0_7] : memref<496x128xbf16, #tpu.memory_space<vmem>>, vector<72x64xbf16>
    %c240 = arith.constant 240 : index
    %c0_8 = arith.constant 0 : index
    %6 = vector.load %arg2[%c240, %c0_8] : memref<496x128xbf16, #tpu.memory_space<vmem>>, vector<64x16xbf16>
    %c16 = arith.constant 16 : index
    %c0_9 = arith.constant 0 : index
    %7 = vector.load %arg3[%c16, %c0_9] : memref<184x128xf32, #tpu.memory_space<vmem>>, vector<16x64xf32>
    %c32 = arith.constant 32 : index
    %c0_10 = arith.constant 0 : index
    %8 = vector.load %arg3[%c32, %c0_10] : memref<184x128xf32, #tpu.memory_space<vmem>>, vector<64x64xf32>
    %c96 = arith.constant 96 : index
    %c0_11 = arith.constant 0 : index
    %9 = vector.load %arg3[%c96, %c0_11] : memref<184x128xf32, #tpu.memory_space<vmem>>, vector<64x64xf32>
    %c0_12 = arith.constant 0 : index
    %c0_13 = arith.constant 0 : index
    %10 = vector.load %arg2[%c0_12, %c0_13] : memref<496x128xbf16, #tpu.memory_space<vmem>>, vector<8x72xbf16>
    %c0_14 = arith.constant 0 : index
    %c0_15 = arith.constant 0 : index
    %11 = vector.load %arg3[%c0_14, %c0_15] : memref<184x128xf32, #tpu.memory_space<vmem>>, vector<1x64xf32>
    %12 = arith.truncf %0 : vector<16x8xf32> to vector<16x8xbf16>
    %cst = arith.constant dense<0.000000e+00> : vector<16x72xf32>
    %13 = tpu.matmul %12, %10, %cst {dimension_numbers = #tpu.dot_dimension_numbers<[1], [0], [0], [1], [0, 0, 1, 1], [], []>} : vector<16x8xbf16>, vector<8x72xbf16>, vector<16x72xf32> -> vector<16x72xf32>
    %14 = arith.truncf %13 : vector<16x72xf32> to vector<16x72xbf16>
    %cst_16 = arith.constant dense<0.000000e+00> : vector<16x64xf32>
    %15 = tpu.matmul %14, %4, %cst_16 {dimension_numbers = #tpu.dot_dimension_numbers<[1], [0], [0], [1], [0, 0, 1, 1], [], []>} : vector<16x72xbf16>, vector<72x64xbf16>, vector<16x64xf32> -> vector<16x64xf32>
    %cst_17 = arith.constant dense<0.000000e+00> : vector<16x64xf32>
    %16 = tpu.matmul %14, %5, %cst_17 {dimension_numbers = #tpu.dot_dimension_numbers<[1], [0], [0], [1], [0, 0, 1, 1], [], []>} : vector<16x72xbf16>, vector<72x64xbf16>, vector<16x64xf32> -> vector<16x64xf32>
    %17 = arith.mulf %16, %7 : vector<16x64xf32>
    %cst_18 = arith.constant dense<0.000000e+00> : vector<64xf32>
    %18 = vector.multi_reduction <add>, %17, %cst_18 [0] : vector<16x64xf32> to vector<64xf32>
    %19 = vector.shape_cast %18 : vector<64xf32> to vector<1x64xf32>
    %20 = vector.broadcast %19 : vector<1x64xf32> to vector<16x64xf32>
    %21 = arith.addf %15, %20 : vector<16x64xf32>
    %cst_19 = arith.constant 2.000000e-01 : f32
    %22 = vector.broadcast %cst_19 : f32 to vector<16x64xf32>
    %23 = arith.mulf %22, %21 : vector<16x64xf32>
    %24 = arith.maximumf %21, %23 : vector<16x64xf32>
    %cst_20 = arith.constant 0.000000e+00 : f32
    %25 = vector.broadcast %cst_20 : f32 to vector<16x64xf32>
    %26 = arith.cmpf ogt, %1, %25 : vector<16x64xf32>
    %cst_21 = arith.constant -1.000000e+30 : f32
    %27 = vector.broadcast %cst_21 : f32 to vector<16x64xf32>
    %28 = arith.select %26, %24, %27 : vector<16x64xi1>, vector<16x64xf32>
    %cst_22 = arith.constant dense<0xFF800000> : vector<16xf32>
    %29 = vector.multi_reduction <maximumf>, %28, %cst_22 [1] : vector<16x64xf32> to vector<16xf32>
    %30 = vector.shape_cast %29 : vector<16xf32> to vector<16x1xf32>
    %31 = vector.broadcast %30 : vector<16x1xf32> to vector<16x64xf32>
    %32 = arith.subf %28, %31 : vector<16x64xf32>
    %33 = math.exp %32 : vector<16x64xf32>
    %cst_23 = arith.constant dense<0.000000e+00> : vector<16x64xf32>
    %34 = tpu.matmul %33, %8, %cst_23 {dimension_numbers = #tpu.dot_dimension_numbers<[1], [0], [0], [1], [0, 0, 1, 1], [], []>} : vector<16x64xf32>, vector<64x64xf32>, vector<16x64xf32> -> vector<16x64xf32>
    %35 = tpu.reciprocal %34 {approx = true} : vector<16x64xf32> -> vector<16x64xf32>
    %36 = arith.mulf %33, %35 : vector<16x64xf32>
    %37 = vector.extract_strided_slice %14 {offsets = [0, 0], sizes = [16, 64], strides = [1, 1]} : vector<16x72xbf16> to vector<16x64xbf16>
    %cst_24 = arith.constant dense<0.000000e+00> : vector<64x64xf32>
    %38 = tpu.matmul %6, %37, %cst_24 {dimension_numbers = #tpu.dot_dimension_numbers<[1], [0], [0], [1], [0, 0, 1, 1], [], []>} : vector<64x16xbf16>, vector<16x64xbf16>, vector<64x64xf32> -> vector<64x64xf32>
    %39 = arith.mulf %38, %9 : vector<64x64xf32>
    %40 = arith.truncf %36 : vector<16x64xf32> to vector<16x64xbf16>
    %41 = arith.truncf %39 : vector<64x64xf32> to vector<64x64xbf16>
    %cst_25 = arith.constant dense<0.000000e+00> : vector<16x64xf32>
    %42 = tpu.matmul %40, %41, %cst_25 {dimension_numbers = #tpu.dot_dimension_numbers<[1], [0], [0], [1], [0, 0, 1, 1], [], []>} : vector<16x64xbf16>, vector<64x64xbf16>, vector<16x64xf32> -> vector<16x64xf32>
    %43 = vector.broadcast %11 : vector<1x64xf32> to vector<16x64xf32>
    %44 = arith.addf %42, %43 : vector<16x64xf32>
    %cst_26 = arith.constant 2.000000e-01 : f32
    %45 = vector.broadcast %cst_26 : f32 to vector<16x64xf32>
    %46 = arith.mulf %45, %44 : vector<16x64xf32>
    %47 = arith.maximumf %44, %46 : vector<16x64xf32>
    %c16_27 = arith.constant 16 : index
    %c0_28 = arith.constant 0 : index
    %48 = vector.load %arg2[%c16_27, %c0_28] : memref<496x128xbf16, #tpu.memory_space<vmem>>, vector<64x72xbf16>
    %c8_29 = arith.constant 8 : index
    %c0_30 = arith.constant 0 : index
    %49 = vector.load %arg3[%c8_29, %c0_30] : memref<184x128xf32, #tpu.memory_space<vmem>>, vector<1x64xf32>
    %50 = arith.truncf %47 : vector<16x64xf32> to vector<16x64xbf16>
    %cst_31 = arith.constant dense<0.000000e+00> : vector<16x72xf32>
    %51 = tpu.matmul %50, %48, %cst_31 {dimension_numbers = #tpu.dot_dimension_numbers<[1], [0], [0], [1], [0, 0, 1, 1], [], []>} : vector<16x64xbf16>, vector<64x72xbf16>, vector<16x72xf32> -> vector<16x72xf32>
    %52 = arith.truncf %51 : vector<16x72xf32> to vector<16x72xbf16>
    %cst_32 = arith.constant dense<0.000000e+00> : vector<16x64xf32>
    %53 = tpu.matmul %52, %4, %cst_32 {dimension_numbers = #tpu.dot_dimension_numbers<[1], [0], [0], [1], [0, 0, 1, 1], [], []>} : vector<16x72xbf16>, vector<72x64xbf16>, vector<16x64xf32> -> vector<16x64xf32>
    %cst_33 = arith.constant dense<0.000000e+00> : vector<16x64xf32>
    %54 = tpu.matmul %52, %5, %cst_33 {dimension_numbers = #tpu.dot_dimension_numbers<[1], [0], [0], [1], [0, 0, 1, 1], [], []>} : vector<16x72xbf16>, vector<72x64xbf16>, vector<16x64xf32> -> vector<16x64xf32>
    %55 = arith.mulf %54, %7 : vector<16x64xf32>
    %cst_34 = arith.constant dense<0.000000e+00> : vector<64xf32>
    %56 = vector.multi_reduction <add>, %55, %cst_34 [0] : vector<16x64xf32> to vector<64xf32>
    %57 = vector.shape_cast %56 : vector<64xf32> to vector<1x64xf32>
    %58 = vector.broadcast %57 : vector<1x64xf32> to vector<16x64xf32>
    %59 = arith.addf %53, %58 : vector<16x64xf32>
    %cst_35 = arith.constant 2.000000e-01 : f32
    %60 = vector.broadcast %cst_35 : f32 to vector<16x64xf32>
    %61 = arith.mulf %60, %59 : vector<16x64xf32>
    %62 = arith.maximumf %59, %61 : vector<16x64xf32>
    %cst_36 = arith.constant 0.000000e+00 : f32
    %63 = vector.broadcast %cst_36 : f32 to vector<16x64xf32>
    %64 = arith.cmpf ogt, %1, %63 : vector<16x64xf32>
    %cst_37 = arith.constant -1.000000e+30 : f32
    %65 = vector.broadcast %cst_37 : f32 to vector<16x64xf32>
    %66 = arith.select %64, %62, %65 : vector<16x64xi1>, vector<16x64xf32>
    %cst_38 = arith.constant dense<0xFF800000> : vector<16xf32>
    %67 = vector.multi_reduction <maximumf>, %66, %cst_38 [1] : vector<16x64xf32> to vector<16xf32>
    %68 = vector.shape_cast %67 : vector<16xf32> to vector<16x1xf32>
    %69 = vector.broadcast %68 : vector<16x1xf32> to vector<16x64xf32>
    %70 = arith.subf %66, %69 : vector<16x64xf32>
    %71 = math.exp %70 : vector<16x64xf32>
    %cst_39 = arith.constant dense<0.000000e+00> : vector<16x64xf32>
    %72 = tpu.matmul %71, %8, %cst_39 {dimension_numbers = #tpu.dot_dimension_numbers<[1], [0], [0], [1], [0, 0, 1, 1], [], []>} : vector<16x64xf32>, vector<64x64xf32>, vector<16x64xf32> -> vector<16x64xf32>
    %73 = tpu.reciprocal %72 {approx = true} : vector<16x64xf32> -> vector<16x64xf32>
    %74 = arith.mulf %71, %73 : vector<16x64xf32>
    %75 = vector.extract_strided_slice %52 {offsets = [0, 0], sizes = [16, 64], strides = [1, 1]} : vector<16x72xbf16> to vector<16x64xbf16>
    %cst_40 = arith.constant dense<0.000000e+00> : vector<64x64xf32>
    %76 = tpu.matmul %6, %75, %cst_40 {dimension_numbers = #tpu.dot_dimension_numbers<[1], [0], [0], [1], [0, 0, 1, 1], [], []>} : vector<64x16xbf16>, vector<16x64xbf16>, vector<64x64xf32> -> vector<64x64xf32>
    %77 = arith.mulf %76, %9 : vector<64x64xf32>
    %78 = arith.truncf %74 : vector<16x64xf32> to vector<16x64xbf16>
    %79 = arith.truncf %77 : vector<64x64xf32> to vector<64x64xbf16>
    %cst_41 = arith.constant dense<0.000000e+00> : vector<16x64xf32>
    %80 = tpu.matmul %78, %79, %cst_41 {dimension_numbers = #tpu.dot_dimension_numbers<[1], [0], [0], [1], [0, 0, 1, 1], [], []>} : vector<16x64xbf16>, vector<64x64xbf16>, vector<16x64xf32> -> vector<16x64xf32>
    %81 = vector.broadcast %49 : vector<1x64xf32> to vector<16x64xf32>
    %82 = arith.addf %80, %81 : vector<16x64xf32>
    %cst_42 = arith.constant 2.000000e-01 : f32
    %83 = vector.broadcast %cst_42 : f32 to vector<16x64xf32>
    %84 = arith.mulf %83, %82 : vector<16x64xf32>
    %85 = arith.maximumf %82, %84 : vector<16x64xf32>
    %c304 = arith.constant 304 : index
    %c0_43 = arith.constant 0 : index
    %86 = vector.load %arg2[%c304, %c0_43] : memref<496x128xbf16, #tpu.memory_space<vmem>>, vector<8x16xbf16>
    %87 = arith.truncf %85 : vector<16x64xf32> to vector<16x64xbf16>
    %cst_44 = arith.constant dense<0.000000e+00> : vector<8x64xf32>
    %88 = tpu.matmul %86, %87, %cst_44 {dimension_numbers = #tpu.dot_dimension_numbers<[1], [0], [0], [1], [0, 0, 1, 1], [], []>} : vector<8x16xbf16>, vector<16x64xbf16>, vector<8x64xf32> -> vector<8x64xf32>
    %89 = arith.truncf %88 : vector<8x64xf32> to vector<8x64xbf16>
    %c320 = arith.constant 320 : index
    %c0_45 = arith.constant 0 : index
    %90 = vector.load %arg2[%c320, %c0_45] : memref<496x128xbf16, #tpu.memory_space<vmem>>, vector<64x32xbf16>
    %cst_46 = arith.constant dense<0.000000e+00> : vector<8x32xf32>
    %91 = tpu.matmul %89, %90, %cst_46 {dimension_numbers = #tpu.dot_dimension_numbers<[1], [0], [0], [1], [0, 0, 1, 1], [], []>} : vector<8x64xbf16>, vector<64x32xbf16>, vector<8x32xf32> -> vector<8x32xf32>
    %92 = arith.truncf %2 : vector<8x8xf32> to vector<8x8xbf16>
    %c384 = arith.constant 384 : index
    %c0_47 = arith.constant 0 : index
    %93 = vector.load %arg2[%c384, %c0_47] : memref<496x128xbf16, #tpu.memory_space<vmem>>, vector<8x32xbf16>
    %cst_48 = arith.constant dense<0.000000e+00> : vector<8x32xf32>
    %94 = tpu.matmul %92, %93, %cst_48 {dimension_numbers = #tpu.dot_dimension_numbers<[1], [0], [0], [1], [0, 0, 1, 1], [], []>} : vector<8x8xbf16>, vector<8x32xbf16>, vector<8x32xf32> -> vector<8x32xf32>
    %95 = arith.addf %91, %94 : vector<8x32xf32>
    %c160_49 = arith.constant 160 : index
    %c0_50 = arith.constant 0 : index
    %96 = vector.load %arg3[%c160_49, %c0_50] : memref<184x128xf32, #tpu.memory_space<vmem>>, vector<1x32xf32>
    %97 = vector.broadcast %96 : vector<1x32xf32> to vector<8x32xf32>
    %98 = arith.addf %95, %97 : vector<8x32xf32>
    %cst_51 = arith.constant 0.000000e+00 : f32
    %99 = vector.broadcast %cst_51 : f32 to vector<8x32xf32>
    %100 = arith.maximumf %98, %99 : vector<8x32xf32>
    %101 = arith.truncf %100 : vector<8x32xf32> to vector<8x32xbf16>
    %c400 = arith.constant 400 : index
    %c0_52 = arith.constant 0 : index
    %102 = vector.load %arg2[%c400, %c0_52] : memref<496x128xbf16, #tpu.memory_space<vmem>>, vector<32x32xbf16>
    %cst_53 = arith.constant dense<0.000000e+00> : vector<8x32xf32>
    %103 = tpu.matmul %101, %102, %cst_53 {dimension_numbers = #tpu.dot_dimension_numbers<[1], [0], [0], [1], [0, 0, 1, 1], [], []>} : vector<8x32xbf16>, vector<32x32xbf16>, vector<8x32xf32> -> vector<8x32xf32>
    %c168 = arith.constant 168 : index
    %c0_54 = arith.constant 0 : index
    %104 = vector.load %arg3[%c168, %c0_54] : memref<184x128xf32, #tpu.memory_space<vmem>>, vector<1x32xf32>
    %105 = vector.broadcast %104 : vector<1x32xf32> to vector<8x32xf32>
    %106 = arith.addf %103, %105 : vector<8x32xf32>
    %cst_55 = arith.constant 0.000000e+00 : f32
    %107 = vector.broadcast %cst_55 : f32 to vector<8x32xf32>
    %108 = arith.maximumf %106, %107 : vector<8x32xf32>
    %109 = arith.truncf %108 : vector<8x32xf32> to vector<8x32xbf16>
    %c432 = arith.constant 432 : index
    %c0_56 = arith.constant 0 : index
    %110 = vector.load %arg2[%c432, %c0_56] : memref<496x128xbf16, #tpu.memory_space<vmem>>, vector<32x28xbf16>
    %cst_57 = arith.constant dense<0.000000e+00> : vector<8x28xf32>
    %111 = tpu.matmul %109, %110, %cst_57 {dimension_numbers = #tpu.dot_dimension_numbers<[1], [0], [0], [1], [0, 0, 1, 1], [], []>} : vector<8x32xbf16>, vector<32x28xbf16>, vector<8x28xf32> -> vector<8x28xf32>
    %c176 = arith.constant 176 : index
    %c0_58 = arith.constant 0 : index
    %112 = vector.load %arg3[%c176, %c0_58] : memref<184x128xf32, #tpu.memory_space<vmem>>, vector<1x28xf32>
    %113 = vector.broadcast %112 : vector<1x28xf32> to vector<8x28xf32>
    %114 = arith.addf %111, %113 : vector<8x28xf32>
    %115 = arith.addf %114, %3 : vector<8x28xf32>
    %cst_59 = arith.constant 0.000000e+00 : f32
    %116 = vector.broadcast %cst_59 : f32 to vector<8x28xf32>
    %117 = arith.cmpf oge, %115, %116 : vector<8x28xf32>
    %118 = arith.extui %117 : vector<8x28xi1> to vector<8x28xi32>
    %119 = arith.sitofp %118 : vector<8x28xi32> to vector<8x28xf32>
    %120 = arith.truncf %119 : vector<8x28xf32> to vector<8x28xbf16>
    %c464 = arith.constant 464 : index
    %c0_60 = arith.constant 0 : index
    %121 = vector.load %arg2[%c464, %c0_60] : memref<496x128xbf16, #tpu.memory_space<vmem>>, vector<28x128xbf16>
    %cst_61 = arith.constant dense<0.000000e+00> : vector<8x128xf32>
    %122 = tpu.matmul %120, %121, %cst_61 {dimension_numbers = #tpu.dot_dimension_numbers<[1], [0], [0], [1], [0, 0, 1, 1], [], []>} : vector<8x28xbf16>, vector<28x128xbf16>, vector<8x128xf32> -> vector<8x128xf32>
    %c0_62 = arith.constant 0 : index
    %c0_63 = arith.constant 0 : index
    %123 = vector.load %arg4[%c0_62, %c0_63] : memref<8x128xf32, #tpu.memory_space<vmem>>, vector<8x128xf32>
    tpu.vector_store %arg4[%c0_62, %c0_63], %122 {strides = array<i32>} : memref<8x128xf32, #tpu.memory_space<vmem>>, vector<8x128xf32>,
    return
  }
}

</mosaic_0001>

<llo_original>
// kernel: tpu_custom_call.1
$region0: #{tpu_custom_call.1}
  #allocation0 [shape = 'u32[]', space=smem, size = 0x4, offset = 0x4, fixed_abs, tag = 'smem constant byte address 0x4 - core index']
  #allocation1 [shape = 'u32[72,128]{1,0:T(1,128)}', space=vmem, size = 0x9000, scoped, tag = 'internal scratch']
  %s0 = inlined_call_operand.hbm [shape: f32[16,72], index: 0, kind: input, shape index: {}]
  %s1 = inlined_call_operand.hbm [shape: f32[8,36], index: 1, kind: input, shape index: {}]
  %s2 = inlined_call_operand.hbm [shape: bf16[496,128], index: 2, kind: input, shape index: {}]
  %s3 = inlined_call_operand.hbm [shape: f32[184,128], index: 3, kind: input, shape index: {}]
  %s4 = inlined_call_operand.hbm [shape: f32[8,128], index: 4, kind: output, shape index: {}]
  %s5 = sld [smem:[#allocation0]]
  $region42: #{tpu_custom_call.1} parent=0
    _
  %s7 = ssub.s32 1, %s5
  %s8 = scalar_select 0, %s7, %s5
  $region1: #{tpu_custom_call.1} parent=0
    #allocation2 [shape = 'u8[8192]{0}', space=vmem, size = 0x2000, scoped, tag = 'input window, operand 0, single buffered']
    #allocation3 [shape = 's32[1]{0}', space=sflag, size = 0x4, scoped, tag = 'scoped memory for tpu_custom_call.1']
    #allocation4 [shape = 's32[1]{0}', space=sflag, size = 0x4, scoped, tag = 'scoped memory for tpu_custom_call.1']
    #allocation5 [shape = 'u8[4096]{0}', space=vmem, size = 0x1000, scoped, tag = 'input window, operand 1, single buffered']
    #allocation6 [shape = 's32[1]{0}', space=sflag, size = 0x4, scoped, tag = 'scoped memory for tpu_custom_call.1']
    #allocation7 [shape = 'u8[126976]{0}', space=vmem, size = 0x1f000, scoped, tag = 'input window, operand 2, single buffered']
    #allocation8 [shape = 'u8[94208]{0}', space=vmem, size = 0x17000, scoped, tag = 'input window, operand 3, single buffered']
    #allocation9 [shape = 's32[1]{0}', space=sflag, size = 0x4, scoped, tag = 'scoped memory for tpu_custom_call.1']
    #allocation10 [shape = 'u8[4096]{0}', space=vmem, size = 0x1000, scoped, tag = 'output window, operand 0, single buffered']
    %9 = vsyncpa [#allocation3], 0
    %10 = vsyncpa [#allocation6], 0
    %11 = vsyncpa [#allocation9], 0
    %12 = vsyncpa [#allocation4], 0
    // Predicated region
    $region2: #{tpu_custom_call.1} parent=1 // pred_check
      _
    $region3: #{tpu_custom_call.1} parent=1 // pred_check_branch
      %14 = sbr.rel (0) target = $region5
    $region4: #{tpu_custom_call.1} parent=1 // pred_region
      %16 = vsyncadd [#allocation3], 0
      %s17 = sshll.u32 %s0, 4
      %s18 = int_to_ptr.hbm [resolvable:$true] %s17
      %s19 = sshll.u32 [#allocation2], 4
      %s20 = int_to_ptr.vmem [resolvable:$true] %s19
      %25 = dma.hbm_to_vmem [thread:$0]  %s18, 256, %s20, [#allocation3], 128, 128, 8
    $region5: #{tpu_custom_call.1} parent=1 // pred_fallthru
      _
    // Predicated region
    $region6: #{tpu_custom_call.1} parent=1 // pred_check
      _
    $region7: #{tpu_custom_call.1} parent=1 // pred_check_branch
      %27 = sbr.rel (0) target = $region9
    $region8: #{tpu_custom_call.1} parent=1 // pred_region
      %29 = vsyncadd [#allocation6], 0
      %s31 = sshll.u32 %s1, 4
      %s32 = int_to_ptr.hbm [resolvable:$true] %s31
      %s33 = sshll.u32 [#allocation5], 4
      %s34 = int_to_ptr.vmem [resolvable:$true] %s33
      %36 = dma.hbm_to_vmem [thread:$0]  %s32, 128, %s34, [#allocation6]
    $region9: #{tpu_custom_call.1} parent=1 // pred_fallthru
      _
    // Predicated region
    $region10: #{tpu_custom_call.1} parent=1 // pred_check
      _
    $region11: #{tpu_custom_call.1} parent=1 // pred_check_branch
      %38 = sbr.rel (0) target = $region13
    $region12: #{tpu_custom_call.1} parent=1 // pred_region
      %40 = vsyncadd [#allocation6], 0
      %s41 = sshll.u32 %s2, 4
      %s42 = int_to_ptr.hbm [resolvable:$true] %s41
      %s43 = sshll.u32 [#allocation7], 4
      %s44 = int_to_ptr.vmem [resolvable:$true] %s43
      %49 = dma.hbm_to_vmem [thread:$0]  %s42, 3968, %s44, [#allocation6], 64, 64, 4
    $region13: #{tpu_custom_call.1} parent=1 // pred_fallthru
      _
    // Predicated region
    $region14: #{tpu_custom_call.1} parent=1 // pred_check
      _
    $region15: #{tpu_custom_call.1} parent=1 // pred_check_branch
      %51 = sbr.rel (0) target = $region17
    $region16: #{tpu_custom_call.1} parent=1 // pred_region
      %53 = vsyncadd [#allocation9], 0
      %s54 = sshll.u32 %s3, 4
      %s55 = int_to_ptr.hbm [resolvable:$true] %s54
      %s56 = sshll.u32 [#allocation8], 4
      %s57 = int_to_ptr.vmem [resolvable:$true] %s56
      %62 = dma.hbm_to_vmem [thread:$0]  %s55, 2944, %s57, [#allocation9], 128, 128, 8
    $region17: #{tpu_custom_call.1} parent=1 // pred_fallthru
      _
    // Predicated region
    $region18: #{tpu_custom_call.1} parent=1 // pred_check
      _
    $region19: #{tpu_custom_call.1} parent=1 // pred_check_branch
      %64 = sbr.rel (0) target = $region21
    $region20: #{tpu_custom_call.1} parent=1 // pred_region
      %66 = dma.done [#allocation3], 256
    $region21: #{tpu_custom_call.1} parent=1 // pred_fallthru
      _
    // Predicated region
    $region22: #{tpu_custom_call.1} parent=1 // pred_check
      _
    $region23: #{tpu_custom_call.1} parent=1 // pred_check_branch
      %68 = sbr.rel (0) target = $region25
    $region24: #{tpu_custom_call.1} parent=1 // pred_region
      %70 = dma.done [#allocation6], 128
    $region25: #{tpu_custom_call.1} parent=1 // pred_fallthru
      _
    // Predicated region
    $region26: #{tpu_custom_call.1} parent=1 // pred_check
      _
    $region27: #{tpu_custom_call.1} parent=1 // pred_check_branch
      %72 = sbr.rel (0) target = $region29
    $region28: #{tpu_custom_call.1} parent=1 // pred_region
      %74 = dma.done [#allocation6], 3968
    $region29: #{tpu_custom_call.1} parent=1 // pred_fallthru
      _
    // Predicated region
    $region30: #{tpu_custom_call.1} parent=1 // pred_check
      _
    $region31: #{tpu_custom_call.1} parent=1 // pred_check_branch
      %76 = sbr.rel (0) target = $region33
    $region32: #{tpu_custom_call.1} parent=1 // pred_region
      %78 = dma.done [#allocation9], 2944
    $region33: #{tpu_custom_call.1} parent=1 // pred_fallthru
      _
    %v80 = vld [vmem:[#allocation2] sm:$0xff]
    %v81 = vld [vmem:[#allocation2 + $0x8] sm:$0xff]
    %v82 = vld [vmem:[#allocation5] sm:$0xff]
    %v83 = vld [vmem:[#allocation7 + $0x28] sm:$0xf]
    %v84 = vld [vmem:[#allocation7 + $0x2c] sm:$0xf]
    %v85 = vld [vmem:[#allocation7 + $0x30] sm:$0xf]
    %v86 = vld [vmem:[#allocation7 + $0x34] sm:$0xf]
    %v87 = vld [vmem:[#allocation7 + $0x38] sm:$0xf]
    %v88 = vld [vmem:[#allocation7 + $0x3c] sm:$0xf]
    %v89 = vld [vmem:[#allocation7 + $0x40] sm:$0xf]
    %v90 = vld [vmem:[#allocation7 + $0x44] sm:$0xf]
    %v91 = vld [vmem:[#allocation7 + $0x48] sm:$0xf]
    %v92 = vld [vmem:[#allocation7 + $0x50] sm:$0xf]
    %v93 = vld [vmem:[#allocation7 + $0x54] sm:$0xf]
    %v94 = vld [vmem:[#allocation7 + $0x58] sm:$0xf]
    %v95 = vld [vmem:[#allocation7 + $0x5c] sm:$0xf]
    %v96 = vld [vmem:[#allocation7 + $0x60] sm:$0xf]
    %v97 = vld [vmem:[#allocation7 + $0x64] sm:$0xf]
    %v98 = vld [vmem:[#allocation7 + $0x68] sm:$0xf]
    %v99 = vld [vmem:[#allocation7 + $0x6c] sm:$0xf]
    %v100 = vld [vmem:[#allocation7 + $0x70] sm:$0xf]
    %v101 = vld [vmem:[#allocation7 + $0x78] sm:$0xf]
    %v102 = vld [vmem:[#allocation7 + $0x7c] sm:$0xf]
    %v103 = vld [vmem:[#allocation7 + $0x80] sm:$0xf]
    %v104 = vld [vmem:[#allocation7 + $0x84] sm:$0xf]
    %v105 = vld [vmem:[#allocation7 + $0x88] sm:$0xf]
    %v106 = vld [vmem:[#allocation7 + $0x8c] sm:$0xf]
    %v107 = vld [vmem:[#allocation7 + $0x90] sm:$0xf]
    %v108 = vld [vmem:[#allocation7 + $0x94] sm:$0xf]
    %v109 = vld [vmem:[#allocation8 + $0x10] sm:$0xff]
    %v110 = vld [vmem:[#allocation8 + $0x18] sm:$0xff]
    %v111 = vld [vmem:[#allocation8 + $0x20] sm:$0xff]
    %v112 = vld [vmem:[#allocation8 + $0x28] sm:$0xff]
    %v113 = vld [vmem:[#allocation8 + $0x30] sm:$0xff]
    %v114 = vld [vmem:[#allocation8 + $0x38] sm:$0xff]
    %v115 = vld [vmem:[#allocation8 + $0x40] sm:$0xff]
    %v116 = vld [vmem:[#allocation8 + $0x48] sm:$0xff]
    %v117 = vld [vmem:[#allocation8 + $0x50] sm:$0xff]
    %v118 = vld [vmem:[#allocation8 + $0x58] sm:$0xff]
    %v119 = vld [vmem:[#allocation8 + $0x60] sm:$0xff]
    %v120 = vld [vmem:[#allocation8 + $0x68] sm:$0xff]
    %v121 = vld [vmem:[#allocation8 + $0x70] sm:$0xff]
    %v122 = vld [vmem:[#allocation8 + $0x78] sm:$0xff]
    %v123 = vld [vmem:[#allocation8 + $0x80] sm:$0xff]
    %v124 = vld [vmem:[#allocation8 + $0x88] sm:$0xff]
    %v125 = vld [vmem:[#allocation8 + $0x90] sm:$0xff]
    %v126 = vld [vmem:[#allocation8 + $0x98] sm:$0xff]
    %v127 = vld [vmem:[#allocation7] sm:$0xf]
    %v128 = vld [vmem:[#allocation8] sm:$0x1]
    %v129 = vpack.c.bf16 %v81, %v80
    %vm130 = vcmask 64512
    %v132 = vsel %vm130, %v129, 0
    %vm134 = vcmask 1043456
    %v136 = vsel %vm134, %v127, 0
    %138 = vmatpush.bf16.msra.mxu0 0
    %139 = vmatpush.bf16.msra.mxu0 0
    %140 = vmatpush.bf16.msra.mxu0 0
    %141 = vmatpush.bf16.msra.mxu0 0
    %142 = vmatpush.bf16.msra.mxu0 0
    %143 = vmatpush.bf16.msra.mxu0 0
    %144 = vmatpush.bf16.msra.mxu0 0
    %145 = vmatpush.bf16.msra.mxu0 %v136
    %146 = vmatmul.bf16.gmra.mxu0 %v132
    %v147 = vpop.f32.mrf.mxu0
    %v148 = vadd.f32 0.0, %v147
    %v149 = vpop.f32.mrf.mxu0
    %v150 = vadd.f32 0.0, %v149
    %151 = vdwg.mxu0
    %v152 = vpack.c.bf16 %v148, %v148
    %v153 = vpack.c.bf16 %v150, %v150
    %v156 = vunpack.c.l.b16 %v152
    %v157 = vunpack.c.l.b16 %v153
    %v158 = vpack.c.b16 %v157, %v156
    %v168 = vunpack.c.l.b16 %v92
    %v169 = vunpack.c.l.b16 %v93
    %v170 = vunpack.c.l.b16 %v94
    %v171 = vunpack.c.l.b16 %v95
    %v172 = vunpack.c.l.b16 %v96
    %v173 = vunpack.c.l.b16 %v97
    %v174 = vunpack.c.l.b16 %v98
    %v175 = vunpack.c.l.b16 %v99
    %v176 = vunpack.c.l.b16 %v100
    %v177 = vpack.c.b16 %v169, %v168
    %v178 = vpack.c.b16 %v171, %v170
    %v179 = vpack.c.b16 %v173, %v172
    %v180 = vpack.c.b16 %v175, %v174
    %v181 = vpack.c.b16 %v176, %v176
    %vm186 = vcmask 588800
    %v188 = vsel %vm186, %v158, 0
    %v191 = vsel %vm134, %v181, 0
    %193 = vmatpush.bf16.msra.mxu0 0
    %194 = vmatpush.bf16.msra.mxu0 0
    %195 = vmatpush.bf16.msra.mxu0 0
    %196 = vmatpush.bf16.msra.mxu0 %v191
    %197 = vmatpush.bf16.msra.mxu0 %v180
    %198 = vmatpush.bf16.msra.mxu0 %v179
    %199 = vmatpush.bf16.msra.mxu0 %v178
    %200 = vmatpush.bf16.msra.mxu0 %v177
    %201 = vmatmul.bf16.gmra.mxu0 %v188
    %v202 = vpop.f32.mrf.mxu0
    %v203 = vadd.f32 0.0, %v202
    %v204 = vpop.f32.mrf.mxu0
    %v205 = vadd.f32 0.0, %v204
    %206 = vdwg.mxu0
    %v207 = vmul.f32 %v203, %v109
    %v208 = vmul.f32 %v205, %v110
    %vm209 = vcmask 523264
    %v210 = vsel %vm209, %v207, 0.0
    %v211 = vsel %vm209, %v208, 0.0
    %v212 = vadd.f32 %v210, %v211
    %v213 = vrot.slane %v212, 4
    %v214 = vadd.f32 %v212, %v213
    %v215 = vrot.slane %v214, 2
    %v216 = vadd.f32 %v214, %v215
    %v217 = vrot.slane %v216, 1
    %v218 = vadd.f32 %v216, %v217
    %v228 = vunpack.c.l.b16 %v83
    %v229 = vunpack.c.l.b16 %v84
    %v230 = vunpack.c.l.b16 %v85
    %v231 = vunpack.c.l.b16 %v86
    %v232 = vunpack.c.l.b16 %v87
    %v233 = vunpack.c.l.b16 %v88
    %v234 = vunpack.c.l.b16 %v89
    %v235 = vunpack.c.l.b16 %v90
    %v236 = vunpack.c.l.b16 %v91
    %v237 = vpack.c.b16 %v229, %v228
    %v238 = vpack.c.b16 %v231, %v230
    %v239 = vpack.c.b16 %v233, %v232
    %v240 = vpack.c.b16 %v235, %v234
    %v241 = vpack.c.b16 %v236, %v236
    %v247 = vsel %vm134, %v241, 0
    %249 = vmatpush.bf16.msra.mxu0 0
    %250 = vmatpush.bf16.msra.mxu0 0
    %251 = vmatpush.bf16.msra.mxu0 0
    %252 = vmatpush.bf16.msra.mxu0 %v247
    %253 = vmatpush.bf16.msra.mxu0 %v240
    %254 = vmatpush.bf16.msra.mxu0 %v239
    %255 = vmatpush.bf16.msra.mxu0 %v238
    %256 = vmatpush.bf16.msra.mxu0 %v237
    %257 = vmatmul.bf16.gmra.mxu0 %v188
    %v258 = vpop.f32.mrf.mxu0
    %v259 = vadd.f32 %v218, %v258
    %v260 = vpop.f32.mrf.mxu0
    %v261 = vadd.f32 %v218, %v260
    %262 = vdwg.mxu0
    %v263 = vmul.f32 %v259, 0.2
    %v264 = vmul.f32 %v261, 0.2
    %v265 = vmax.f32 %v259, %v263
    %v266 = vmax.f32 %v261, %v264
    %vm267 = vcmp.gt.f32.partialorder %v80, 0.0
    %vm268 = vcmp.gt.f32.partialorder %v81, 0.0
    %271 = vrot.lane.b32.xlu0 %v265, 8
    %v272 = vpop.permute.xlu0 %271
    %273 = vrot.lane.b32.xlu0 %v266, 8
    %v274 = vpop.permute.xlu0 %273
    %v277 = vsel %vm267, %v272, -1e+30
    %v278 = vsel %vm268, %v274, -1e+30
    %vm279 = vcmask 588864
    %v280 = vsel %vm279, %v277, -inf
    %281 = vmax.xlane.f32.xlu0 %v280
    %v282 = vpop.xlane.xlu0 %281
    %v283 = vsel %vm279, %v278, -inf
    %284 = vmax.xlane.f32.xlu0 %v283
    %v285 = vpop.xlane.xlu0 %284
    %v286 = vsub.f32 %v277, %v282
    %v287 = vsub.f32 %v278, %v285
    %v288 = vmul.f32 %v286, 1.442695
    %v289 = vpow.pop %v288
    %v290 = vmul.f32 %v287, 1.442695
    %v291 = vpow.pop %v290
    %294 = vrot.lane.b32.xlu0 %v289, 120
    %v295 = vpop.permute.xlu0 %294
    %296 = vrot.lane.b32.xlu0 %v291, 120
    %v297 = vpop.permute.xlu0 %296
    %v298 = vsel %vm209, %v295, 0
    %v300 = vsel %vm209, %v297, 0
    %302 = vmatpush.msra.mxu0 0.0
    %303 = vmatpush.msra.mxu0 0.0
    %304 = vmatpush.msra.mxu0 0.0
    %305 = vmatpush.msra.mxu0 0.0
    %306 = vmatpush.msra.mxu0 0.0
    %307 = vmatpush.msra.mxu0 0.0
    %308 = vmatpush.msra.mxu0 0.0
    %309 = vmatpush.msra.mxu0 0.0
    %310 = vmatpush.msra.mxu0 %v118
    %311 = vmatpush.msra.mxu0 %v117
    %312 = vmatpush.msra.mxu0 %v116
    %313 = vmatpush.msra.mxu0 %v115
    %314 = vmatpush.msra.mxu0 %v114
    %315 = vmatpush.msra.mxu0 %v113
    %316 = vmatpush.msra.mxu0 %v112
    %317 = vmatpush.msra.mxu0 %v111
    %318 = vmatmul.f32.gmra.mxu0 %v298
    %v319 = vpop.f32.mrf.mxu0
    %v320 = vadd.f32 0.0, %v319
    %321 = vmatmul.f32.gmra.mxu0 %v300
    %v322 = vpop.f32.mrf.mxu0
    %v323 = vadd.f32 0.0, %v322
    %324 = vdwg.mxu0
    %v325 = vrcp.pop %v320
    %v326 = vrcp.pop %v323
    %329 = vrot.lane.b32.xlu0 %v325, 8
    %v330 = vpop.permute.xlu0 %329
    %331 = vrot.lane.b32.xlu0 %v326, 8
    %v332 = vpop.permute.xlu0 %331
    %v335 = vmul.f32 %v289, %v330
    %v336 = vmul.f32 %v291, %v332
    %v345 = vunpack.c.l.b16 %v101
    %v346 = vunpack.c.l.b16 %v102
    %v347 = vunpack.c.l.b16 %v103
    %v348 = vunpack.c.l.b16 %v104
    %v349 = vunpack.c.l.b16 %v105
    %v350 = vunpack.c.l.b16 %v106
    %v351 = vunpack.c.l.b16 %v107
    %v352 = vunpack.c.l.b16 %v108
    %v353 = vpack.c.b16 %v346, %v345
    %v354 = vpack.c.b16 %v348, %v347
    %v355 = vpack.c.b16 %v350, %v349
    %v356 = vpack.c.b16 %v352, %v351
    %vm358 = vcmask 130048
    %v360 = vsel %vm358, %v353, 0
    %v363 = vsel %vm358, %v354, 0
    %v366 = vsel %vm358, %v355, 0
    %v369 = vsel %vm358, %v356, 0
    %371 = vmatpush.bf16.msra.mxu0 0
    %372 = vmatpush.bf16.msra.mxu0 0
    %373 = vmatpush.bf16.msra.mxu0 0
    %374 = vmatpush.bf16.msra.mxu0 0
    %375 = vmatpush.bf16.msra.mxu0 0
    %376 = vmatpush.bf16.msra.mxu0 0
    %377 = vmatpush.bf16.msra.mxu0 0
    %378 = vmatpush.bf16.msra.mxu0 %v158
    %379 = vmatmul.bf16.gmra.mxu0 %v360
    %v380 = vpop.f32.mrf.mxu0
    %v381 = vadd.f32 0.0, %v380
    %v382 = vpop.f32.mrf.mxu0
    %v383 = vadd.f32 0.0, %v382
    %384 = vmatmul.bf16.gmra.mxu0 %v363
    %v385 = vpop.f32.mrf.mxu0
    %v386 = vadd.f32 0.0, %v385
    %v387 = vpop.f32.mrf.mxu0
    %v388 = vadd.f32 0.0, %v387
    %389 = vmatmul.bf16.gmra.mxu0 %v366
    %v390 = vpop.f32.mrf.mxu0
    %v391 = vadd.f32 0.0, %v390
    %v392 = vpop.f32.mrf.mxu0
    %v393 = vadd.f32 0.0, %v392
    %394 = vmatmul.bf16.gmra.mxu0 %v369
    %v395 = vpop.f32.mrf.mxu0
    %v396 = vadd.f32 0.0, %v395
    %v397 = vpop.f32.mrf.mxu0
    %v398 = vadd.f32 0.0, %v397
    %399 = vdwg.mxu0
    %v400 = vmul.f32 %v381, %v119
    %v401 = vmul.f32 %v383, %v120
    %v402 = vmul.f32 %v386, %v121
    %v403 = vmul.f32 %v388, %v122
    %v404 = vmul.f32 %v391, %v123
    %v405 = vmul.f32 %v393, %v124
    %v406 = vmul.f32 %v396, %v125
    %v407 = vmul.f32 %v398, %v126
    %v408 = vpack.c.bf16 %v336, %v335
    %v409 = vpack.c.bf16 %v401, %v400
    %v410 = vpack.c.bf16 %v403, %v402
    %v411 = vpack.c.bf16 %v405, %v404
    %v412 = vpack.c.bf16 %v407, %v406
    %v413 = vperm.slane %v128, 0
    %415 = vrot.lane.b32.xlu0 %v408, 120
    %v416 = vpop.permute.xlu0 %415
    %v418 = vsel %vm209, %v416, 0
    %420 = vmatpush.bf16.msra.mxu0 0
    %421 = vmatpush.bf16.msra.mxu0 0
    %422 = vmatpush.bf16.msra.mxu0 0
    %423 = vmatpush.bf16.msra.mxu0 0
    %424 = vmatpush.bf16.msra.mxu0 %v412
    %425 = vmatpush.bf16.msra.mxu0 %v411
    %426 = vmatpush.bf16.msra.mxu0 %v410
    %427 = vmatpush.bf16.msra.mxu0 %v409
    %428 = vmatmul.bf16.gmra.mxu0 %v418
    %v429 = vpop.f32.mrf.mxu0
    %v430 = vadd.f32 %v413, %v429
    %v431 = vpop.f32.mrf.mxu0
    %v432 = vadd.f32 %v413, %v431
    %433 = vdwg.mxu0
    %v434 = vmul.f32 %v430, 0.2
    %v435 = vmul.f32 %v432, 0.2
    %v436 = vmax.f32 %v430, %v434
    %v437 = vmax.f32 %v432, %v435
    %v438 = vld [vmem:[#allocation7 + $0x8] sm:$0xf]
    %v439 = vld [vmem:[#allocation7 + $0xc] sm:$0xf]
    %v440 = vld [vmem:[#allocation7 + $0x10] sm:$0xf]
    %v441 = vld [vmem:[#allocation7 + $0x14] sm:$0xf]
    %v442 = vld [vmem:[#allocation7 + $0x18] sm:$0xf]
    %v443 = vld [vmem:[#allocation7 + $0x1c] sm:$0xf]
    %v444 = vld [vmem:[#allocation7 + $0x20] sm:$0xf]
    %v445 = vld [vmem:[#allocation7 + $0x24] sm:$0xf]
    %v446 = vld [vmem:[#allocation8 + $0x8] sm:$0x1]
    %v447 = vpack.c.bf16 %v437, %v436
    %v456 = vunpack.c.l.b16 %v438
    %v457 = vunpack.c.l.b16 %v439
    %v458 = vunpack.c.l.b16 %v440
    %v459 = vunpack.c.l.b16 %v441
    %v460 = vunpack.c.l.b16 %v442
    %v461 = vunpack.c.l.b16 %v443
    %v462 = vunpack.c.l.b16 %v444
    %v463 = vunpack.c.l.b16 %v445
    %v464 = vpack.c.b16 %v457, %v456
    %v465 = vpack.c.b16 %v459, %v458
    %v466 = vpack.c.b16 %v461, %v460
    %v467 = vpack.c.b16 %v463, %v462
    %v473 = vsel %vm209, %v447, 0
    %475 = vmatpush.bf16.msra.mxu0 0
    %476 = vmatpush.bf16.msra.mxu0 0
    %477 = vmatpush.bf16.msra.mxu0 0
    %478 = vmatpush.bf16.msra.mxu0 0
    %479 = vmatpush.bf16.msra.mxu0 %v467
    %480 = vmatpush.bf16.msra.mxu0 %v466
    %481 = vmatpush.bf16.msra.mxu0 %v465
    %482 = vmatpush.bf16.msra.mxu0 %v464
    %483 = vmatmul.bf16.gmra.mxu0 %v473
    %v484 = vpop.f32.mrf.mxu0
    %v485 = vadd.f32 0.0, %v484
    %v486 = vpop.f32.mrf.mxu0
    %v487 = vadd.f32 0.0, %v486
    %488 = vdwg.mxu0
    %v489 = vpack.c.bf16 %v485, %v485
    %v490 = vpack.c.bf16 %v487, %v487
    %v493 = vunpack.c.l.b16 %v489
    %v494 = vunpack.c.l.b16 %v490
    %v495 = vpack.c.b16 %v494, %v493
    %v497 = vsel %vm186, %v495, 0
    %499 = vmatpush.bf16.msra.mxu0 0
    %500 = vmatpush.bf16.msra.mxu0 0
    %501 = vmatpush.bf16.msra.mxu0 0
    %502 = vmatpush.bf16.msra.mxu0 %v191
    %503 = vmatpush.bf16.msra.mxu0 %v180
    %504 = vmatpush.bf16.msra.mxu0 %v179
    %505 = vmatpush.bf16.msra.mxu0 %v178
    %506 = vmatpush.bf16.msra.mxu0 %v177
    %507 = vmatmul.bf16.gmra.mxu0 %v497
    %v508 = vpop.f32.mrf.mxu0
    %v509 = vadd.f32 0.0, %v508
    %v510 = vpop.f32.mrf.mxu0
    %v511 = vadd.f32 0.0, %v510
    %512 = vdwg.mxu0
    %v513 = vmul.f32 %v509, %v109
    %v514 = vmul.f32 %v511, %v110
    %v515 = vsel %vm209, %v513, 0.0
    %v516 = vsel %vm209, %v514, 0.0
    %v517 = vadd.f32 %v515, %v516
    %v518 = vrot.slane %v517, 4
    %v519 = vadd.f32 %v517, %v518
    %v520 = vrot.slane %v519, 2
    %v521 = vadd.f32 %v519, %v520
    %v522 = vrot.slane %v521, 1
    %v523 = vadd.f32 %v521, %v522
    %524 = vmatpush.bf16.msra.mxu0 0
    %525 = vmatpush.bf16.msra.mxu0 0
    %526 = vmatpush.bf16.msra.mxu0 0
    %527 = vmatpush.bf16.msra.mxu0 %v247
    %528 = vmatpush.bf16.msra.mxu0 %v240
    %529 = vmatpush.bf16.msra.mxu0 %v239
    %530 = vmatpush.bf16.msra.mxu0 %v238
    %531 = vmatpush.bf16.msra.mxu0 %v237
    %532 = vmatmul.bf16.gmra.mxu0 %v497
    %v533 = vpop.f32.mrf.mxu0
    %v534 = vadd.f32 %v523, %v533
    %v535 = vpop.f32.mrf.mxu0
    %v536 = vadd.f32 %v523, %v535
    %537 = vdwg.mxu0
    %v538 = vmul.f32 %v534, 0.2
    %v539 = vmul.f32 %v536, 0.2
    %v540 = vmax.f32 %v534, %v538
    %v541 = vmax.f32 %v536, %v539
    %544 = vrot.lane.b32.xlu0 %v540, 8
    %v545 = vpop.permute.xlu0 %544
    %546 = vrot.lane.b32.xlu0 %v541, 8
    %v547 = vpop.permute.xlu0 %546
    %v550 = vsel %vm267, %v545, -1e+30
    %v551 = vsel %vm268, %v547, -1e+30
    %v552 = vsel %vm279, %v550, -inf
    %553 = vmax.xlane.f32.xlu0 %v552
    %v554 = vpop.xlane.xlu0 %553
    %v555 = vsel %vm279, %v551, -inf
    %556 = vmax.xlane.f32.xlu0 %v555
    %v557 = vpop.xlane.xlu0 %556
    %v558 = vsub.f32 %v550, %v554
    %v559 = vsub.f32 %v551, %v557
    %v560 = vmul.f32 %v558, 1.442695
    %v561 = vpow.pop %v560
    %v562 = vmul.f32 %v559, 1.442695
    %v563 = vpow.pop %v562
    %566 = vrot.lane.b32.xlu0 %v561, 120
    %v567 = vpop.permute.xlu0 %566
    %568 = vrot.lane.b32.xlu0 %v563, 120
    %v569 = vpop.permute.xlu0 %568
    %v570 = vsel %vm209, %v567, 0
    %v572 = vsel %vm209, %v569, 0
    %574 = vmatpush.msra.mxu0 0.0
    %575 = vmatpush.msra.mxu0 0.0
    %576 = vmatpush.msra.mxu0 0.0
    %577 = vmatpush.msra.mxu0 0.0
    %578 = vmatpush.msra.mxu0 0.0
    %579 = vmatpush.msra.mxu0 0.0
    %580 = vmatpush.msra.mxu0 0.0
    %581 = vmatpush.msra.mxu0 0.0
    %582 = vmatpush.msra.mxu0 %v118
    %583 = vmatpush.msra.mxu0 %v117
    %584 = vmatpush.msra.mxu0 %v116
    %585 = vmatpush.msra.mxu0 %v115
    %586 = vmatpush.msra.mxu0 %v114
    %587 = vmatpush.msra.mxu0 %v113
    %588 = vmatpush.msra.mxu0 %v112
    %589 = vmatpush.msra.mxu0 %v111
    %590 = vmatmul.f32.gmra.mxu0 %v570
    %v591 = vpop.f32.mrf.mxu0
    %v592 = vadd.f32 0.0, %v591
    %593 = vmatmul.f32.gmra.mxu0 %v572
    %v594 = vpop.f32.mrf.mxu0
    %v595 = vadd.f32 0.0, %v594
    %596 = vdwg.mxu0
    %v597 = vrcp.pop %v592
    %v598 = vrcp.pop %v595
    %601 = vrot.lane.b32.xlu0 %v597, 8
    %v602 = vpop.permute.xlu0 %601
    %603 = vrot.lane.b32.xlu0 %v598, 8
    %v604 = vpop.permute.xlu0 %603
    %v607 = vmul.f32 %v561, %v602
    %v608 = vmul.f32 %v563, %v604
    %610 = vmatpush.bf16.msra.mxu0 0
    %611 = vmatpush.bf16.msra.mxu0 0
    %612 = vmatpush.bf16.msra.mxu0 0
    %613 = vmatpush.bf16.msra.mxu0 0
    %614 = vmatpush.bf16.msra.mxu0 0
    %615 = vmatpush.bf16.msra.mxu0 0
    %616 = vmatpush.bf16.msra.mxu0 0
    %617 = vmatpush.bf16.msra.mxu0 %v495
    %618 = vmatmul.bf16.gmra.mxu0 %v360
    %v619 = vpop.f32.mrf.mxu0
    %v620 = vadd.f32 0.0, %v619
    %v621 = vpop.f32.mrf.mxu0
    %v622 = vadd.f32 0.0, %v621
    %623 = vmatmul.bf16.gmra.mxu0 %v363
    %v624 = vpop.f32.mrf.mxu0
    %v625 = vadd.f32 0.0, %v624
    %v626 = vpop.f32.mrf.mxu0
    %v627 = vadd.f32 0.0, %v626
    %628 = vmatmul.bf16.gmra.mxu0 %v366
    %v629 = vpop.f32.mrf.mxu0
    %v630 = vadd.f32 0.0, %v629
    %v631 = vpop.f32.mrf.mxu0
    %v632 = vadd.f32 0.0, %v631
    %633 = vmatmul.bf16.gmra.mxu0 %v369
    %v634 = vpop.f32.mrf.mxu0
    %v635 = vadd.f32 0.0, %v634
    %v636 = vpop.f32.mrf.mxu0
    %v637 = vadd.f32 0.0, %v636
    %638 = vdwg.mxu0
    %v639 = vmul.f32 %v620, %v119
    %v640 = vmul.f32 %v622, %v120
    %v641 = vmul.f32 %v625, %v121
    %v642 = vmul.f32 %v627, %v122
    %v643 = vmul.f32 %v630, %v123
    %v644 = vmul.f32 %v632, %v124
    %v645 = vmul.f32 %v635, %v125
    %v646 = vmul.f32 %v637, %v126
    %v647 = vpack.c.bf16 %v608, %v607
    %v648 = vpack.c.bf16 %v640, %v639
    %v649 = vpack.c.bf16 %v642, %v641
    %v650 = vpack.c.bf16 %v644, %v643
    %v651 = vpack.c.bf16 %v646, %v645
    %v652 = vperm.slane %v446, 0
    %654 = vrot.lane.b32.xlu0 %v647, 120
    %v655 = vpop.permute.xlu0 %654
    %v657 = vsel %vm209, %v655, 0
    %659 = vmatpush.bf16.msra.mxu0 0
    %660 = vmatpush.bf16.msra.mxu0 0
    %661 = vmatpush.bf16.msra.mxu0 0
    %662 = vmatpush.bf16.msra.mxu0 0
    %663 = vmatpush.bf16.msra.mxu0 %v651
    %664 = vmatpush.bf16.msra.mxu0 %v650
    %665 = vmatpush.bf16.msra.mxu0 %v649
    %666 = vmatpush.bf16.msra.mxu0 %v648
    %667 = vmatmul.bf16.gmra.mxu0 %v657
    %v668 = vpop.f32.mrf.mxu0
    %v669 = vadd.f32 %v652, %v668
    %v670 = vpop.f32.mrf.mxu0
    %v671 = vadd.f32 %v652, %v670
    %672 = vdwg.mxu0
    %v673 = vmul.f32 %v669, 0.2
    %v674 = vmul.f32 %v671, 0.2
    %v675 = vmax.f32 %v669, %v673
    %v676 = vmax.f32 %v671, %v674
    %v677 = vld [vmem:[#allocation7 + $0x98] sm:$0xf]
    %v678 = vpack.c.bf16 %v676, %v675
    %v680 = vsel %vm358, %v677, 0
    %682 = vmatpush.bf16.msra.mxu0 0
    %683 = vmatpush.bf16.msra.mxu0 0
    %684 = vmatpush.bf16.msra.mxu0 0
    %685 = vmatpush.bf16.msra.mxu0 0
    %686 = vmatpush.bf16.msra.mxu0 0
    %687 = vmatpush.bf16.msra.mxu0 0
    %688 = vmatpush.bf16.msra.mxu0 0
    %689 = vmatpush.bf16.msra.mxu0 %v678
    %690 = vmatmul.bf16.gmra.mxu0 %v680
    %v691 = vpop.f32.mrf.mxu0
    %v692 = vadd.f32 0.0, %v691
    %v693 = vpop.f32.mrf.mxu0
    %694 = vdwg.mxu0
    %v695 = vpack.c.bf16 %v692, %v692
    %v696 = vld [vmem:[#allocation7 + $0xa0] sm:$0xf]
    %v697 = vld [vmem:[#allocation7 + $0xa4] sm:$0xf]
    %v698 = vld [vmem:[#allocation7 + $0xa8] sm:$0xf]
    %v699 = vld [vmem:[#allocation7 + $0xac] sm:$0xf]
    %v700 = vld [vmem:[#allocation7 + $0xb0] sm:$0xf]
    %v701 = vld [vmem:[#allocation7 + $0xb4] sm:$0xf]
    %v702 = vld [vmem:[#allocation7 + $0xb8] sm:$0xf]
    %v703 = vld [vmem:[#allocation7 + $0xbc] sm:$0xf]
    %v704 = vpack.c.bf16 %v82, %v82
    %v705 = vld [vmem:[#allocation7 + $0xc0] sm:$0xf]
    %v707 = vsel %vm130, %v704, 0
    %v710 = vsel %vm134, %v705, 0
    %712 = vmatpush.bf16.msra.mxu0 0
    %713 = vmatpush.bf16.msra.mxu0 0
    %714 = vmatpush.bf16.msra.mxu0 0
    %715 = vmatpush.bf16.msra.mxu0 0
    %716 = vmatpush.bf16.msra.mxu0 0
    %717 = vmatpush.bf16.msra.mxu0 0
    %718 = vmatpush.bf16.msra.mxu0 0
    %719 = vmatpush.bf16.msra.mxu0 %v710
    %720 = vmatmul.bf16.gmra.mxu0 %v707
    %v721 = vpop.f32.mrf.mxu0
    %v722 = vadd.f32 0.0, %v721
    %v723 = vpop.f32.mrf.mxu0
    %724 = vdwg.mxu0
    %v733 = vunpack.c.l.b16 %v696
    %v734 = vunpack.c.l.b16 %v697
    %v735 = vunpack.c.l.b16 %v698
    %v736 = vunpack.c.l.b16 %v699
    %v737 = vunpack.c.l.b16 %v700
    %v738 = vunpack.c.l.b16 %v701
    %v739 = vunpack.c.l.b16 %v702
    %v740 = vunpack.c.l.b16 %v703
    %v741 = vpack.c.b16 %v734, %v733
    %v742 = vpack.c.b16 %v736, %v735
    %v743 = vpack.c.b16 %v738, %v737
    %v744 = vpack.c.b16 %v740, %v739
    %v750 = vsel %vm209, %v695, 0
    %752 = vmatpush.bf16.msra.mxu0 0
    %753 = vmatpush.bf16.msra.mxu0 0
    %754 = vmatpush.bf16.msra.mxu0 0
    %755 = vmatpush.bf16.msra.mxu0 0
    %756 = vmatpush.bf16.msra.mxu0 %v744
    %757 = vmatpush.bf16.msra.mxu0 %v743
    %758 = vmatpush.bf16.msra.mxu0 %v742
    %759 = vmatpush.bf16.msra.mxu0 %v741
    %760 = vmatmul.bf16.gmra.mxu0 %v750
    %v761 = vpop.f32.mrf.mxu0
    %v762 = vadd.f32 %v722, %v761
    %v763 = vpop.f32.mrf.mxu0
    %764 = vdwg.mxu0
    %v765 = vld [vmem:[#allocation8 + $0xa0] sm:$0x1]
    %v766 = vperm.slane %v765, 0
    %v767 = vadd.f32 %v762, %v766
    %v768 = vmax.f32 %v767, 0.0
    %v769 = vpack.c.bf16 %v768, %v768
    %v770 = vld [vmem:[#allocation7 + $0xc8] sm:$0xf]
    %v771 = vld [vmem:[#allocation7 + $0xcc] sm:$0xf]
    %v772 = vld [vmem:[#allocation7 + $0xd0] sm:$0xf]
    %v773 = vld [vmem:[#allocation7 + $0xd4] sm:$0xf]
    %v774 = vld [vmem:[#allocation8 + $0xa8] sm:$0x1]
    %v775 = vperm.slane %v774, 0
    %v780 = vunpack.c.l.b16 %v770
    %v781 = vunpack.c.l.b16 %v771
    %v782 = vunpack.c.l.b16 %v772
    %v783 = vunpack.c.l.b16 %v773
    %v784 = vpack.c.b16 %v781, %v780
    %v785 = vpack.c.b16 %v783, %v782
    %vm788 = vcmask 261120
    %v790 = vsel %vm788, %v769, 0
    %792 = vmatpush.bf16.msra.mxu0 0
    %793 = vmatpush.bf16.msra.mxu0 0
    %794 = vmatpush.bf16.msra.mxu0 0
    %795 = vmatpush.bf16.msra.mxu0 0
    %796 = vmatpush.bf16.msra.mxu0 0
    %797 = vmatpush.bf16.msra.mxu0 0
    %798 = vmatpush.bf16.msra.mxu0 %v785
    %799 = vmatpush.bf16.msra.mxu0 %v784
    %800 = vmatmul.bf16.gmra.mxu0 %v790
    %v801 = vpop.f32.mrf.mxu0
    %v802 = vadd.f32 %v775, %v801
    %v803 = vpop.f32.mrf.mxu0
    %804 = vdwg.mxu0
    %v805 = vmax.f32 %v802, 0.0
    %v806 = vpack.c.bf16 %v805, %v805
    %v807 = vld [vmem:[#allocation7 + $0xd8] sm:$0xf]
    %v808 = vld [vmem:[#allocation7 + $0xdc] sm:$0xf]
    %v809 = vld [vmem:[#allocation7 + $0xe0] sm:$0xf]
    %v810 = vld [vmem:[#allocation7 + $0xe4] sm:$0xf]
    %v811 = vld [vmem:[#allocation8 + $0xb0] sm:$0x1]
    %v812 = vperm.slane %v811, 0
    %v817 = vunpack.c.l.b16 %v807
    %v818 = vunpack.c.l.b16 %v808
    %v819 = vunpack.c.l.b16 %v809
    %v820 = vunpack.c.l.b16 %v810
    %v821 = vpack.c.b16 %v818, %v817
    %v822 = vpack.c.b16 %v820, %v819
    %v826 = vsel %vm788, %v806, 0
    %828 = vmatpush.bf16.msra.mxu0 0
    %829 = vmatpush.bf16.msra.mxu0 0
    %830 = vmatpush.bf16.msra.mxu0 0
    %831 = vmatpush.bf16.msra.mxu0 0
    %832 = vmatpush.bf16.msra.mxu0 0
    %833 = vmatpush.bf16.msra.mxu0 0
    %834 = vmatpush.bf16.msra.mxu0 %v822
    %835 = vmatpush.bf16.msra.mxu0 %v821
    %836 = vmatmul.bf16.gmra.mxu0 %v826
    %v837 = vpop.f32.mrf.mxu0
    %v838 = vadd.f32 %v812, %v837
    %v839 = vpop.f32.mrf.mxu0
    %840 = vdwg.mxu0
    %842 = vrot.lane.b32.xlu0 %v82, 120
    %v843 = vpop.permute.xlu0 %842
    %v845 = vadd.f32 %v838, %v843
    %vm846 = vcmp.ge.f32.partialorder %v845, 0.0
    %v847 = vsel %vm846, 1, 0
    %v848 = vcvt.s32.f32 %v847
    %v849 = vpack.c.bf16 %v848, %v848
    %v850 = vld [vmem:[#allocation7 + $0xe8] sm:$0xf]
    %v851 = vld [vmem:[#allocation7 + $0xec] sm:$0xf]
    %v852 = vld [vmem:[#allocation7 + $0xf0] sm:$0xf]
    %v853 = vld [vmem:[#allocation7 + $0xf4] sm:$0x3]
    %v858 = vunpack.c.l.b16 %v850
    %v859 = vunpack.c.l.b16 %v851
    %v860 = vunpack.c.l.b16 %v852
    %v861 = vunpack.c.l.b16 %v853
    %v862 = vpack.c.b16 %v859, %v858
    %v863 = vpack.c.b16 %v861, %v860
    %vm865 = vcmask 228352
    %v867 = vsel %vm865, %v849, 0
    %vm869 = vcmask 1045504
    %v871 = vsel %vm869, %v863, 0
    %873 = vmatpush.bf16.msra.mxu0 0
    %874 = vmatpush.bf16.msra.mxu0 0
    %875 = vmatpush.bf16.msra.mxu0 0
    %876 = vmatpush.bf16.msra.mxu0 0
    %877 = vmatpush.bf16.msra.mxu0 0
    %878 = vmatpush.bf16.msra.mxu0 0
    %879 = vmatpush.bf16.msra.mxu0 %v871
    %880 = vmatpush.bf16.msra.mxu0 %v862
    %881 = vmatmul.bf16.gmra.mxu0 %v867
    %v882 = vpop.f32.mrf.mxu0
    %v883 = vadd.f32 0.0, %v882
    %v884 = vpop.f32.mrf.mxu0
    %885 = vdwg.mxu0
    %886 = vst [vmem:[#allocation10] sm:$0xff] %v883
    // Predicated region
    $region34: #{tpu_custom_call.1} parent=1 // pred_check
      _
    $region35: #{tpu_custom_call.1} parent=1 // pred_check_branch
      %888 = sbr.rel (0) target = $region37
    $region36: #{tpu_custom_call.1} parent=1 // pred_region
      %890 = vsyncadd [#allocation4], 0
      %s892 = sshll.u32 [#allocation10], 4
      %s893 = int_to_ptr.vmem [resolvable:$true] %s892
      %s894 = sshll.u32 %s4, 4
      %s895 = int_to_ptr.hbm [resolvable:$true] %s894
      %897 = dma.vmem_to_hbm [thread:$0]  %s893, 128, %s895, [#allocation4]
    $region37: #{tpu_custom_call.1} parent=1 // pred_fallthru
      _
    // Predicated region
    $region38: #{tpu_custom_call.1} parent=1 // pred_check
      _
    $region39: #{tpu_custom_call.1} parent=1 // pred_check_branch
      %899 = sbr.rel (0) target = $region41
    $region40: #{tpu_custom_call.1} parent=1 // pred_region
      %901 = dma.done [#allocation4], 128
    $region41: #{tpu_custom_call.1} parent=1 // pred_fallthru
      _
    %902 = vsyncpa [#allocation3], 1
    %903 = vsyncpa [#allocation6], 1
    %904 = vsyncpa [#allocation9], 1
    %905 = vsyncpa [#allocation4], 1

</llo_original>
